<compile_context>
chip_gen: v5e
topology: v5e:2x2
jax: 0.10.0
libtpu: 0.0.40
codegen_flags: <defaults>
</compile_context>

<pallas_src>
from functools import partial

import jax
import jax.numpy as jnp
import numpy as np
from jax import lax
from jax.experimental import pallas as pl
from jax.experimental.pallas import tpu as pltpu


# ------------------------------ fused kernel ---------------------------------
def _make_fused_kernel(n_layers, dims_in, bt, T, H, O_pad):
    """Ref order: x (T*bt, D0), layer_slab_0..n-1, fc_slab, out (T*bt, O_pad),
    hid (n_layers*bt, H).  Rows of x/out are time-major within the batch chunk:
    row t*bt + b  <->  (timestep t, batch row b of this chunk)."""

    def kernel(*refs):
        x_ref = refs[0]
        layer_refs = refs[1:1 + n_layers]
        fc_ref = refs[1 + n_layers]
        out_ref = refs[2 + n_layers]
        hid_ref = refs[3 + n_layers]

        seq = x_ref[...]                                     # (T*bt, D0) f32
        finals = []
        for l in range(n_layers):
            D = dims_in[l]
            slab = layer_refs[l]
            w_ih_t = slab[0:D, :]                            # (D, H)
            w_hh_t = slab[D:D + H, :]                        # (H, H)
            bias = slab[D + H:D + H + 1, :]                  # (1, H) == b_ih + b_hh

            # All-timestep input projection in ONE MXU matmul, bias folded in.
            proj = jnp.dot(seq, w_ih_t,
                           preferred_element_type=jnp.float32) + bias   # (T*bt, H)

            # Serial recurrence; h stays in vregs across the (unrolled) steps.
            # TODO(synk): switch to lax.fori_loop(..., unroll=k) carrying h if T
            # grows beyond ~16 (bounded code size / vreg pressure).
            h = jnp.zeros((bt, H), jnp.float32)
            hs = []
            for t in range(T):
                x_t = proj[t * bt:(t + 1) * bt, :]
                h = jnp.tanh(x_t + jnp.dot(h, w_hh_t,
                                           preferred_element_type=jnp.float32))
                hs.append(h)
            finals.append(h)
            seq = jnp.concatenate(hs, axis=0)                # (T*bt, H), time-major

        # One dense store for all final hidden states of this batch chunk.
        hid_ref[...] = jnp.concatenate(finals, axis=0).astype(hid_ref.dtype)

        # Head over the whole chunk at once: ReLU -> FC (lane-padded) -> softmax.
        w_fc = fc_ref[0:H, :]                                # (H, O_pad)
        b_fc = fc_ref[H:H + 1, :]                            # (1, O_pad); pads = -1e30
        act = jnp.maximum(seq, 0.0)
        logits = jnp.dot(act, w_fc, preferred_element_type=jnp.float32) + b_fc
        m = jnp.max(logits, axis=-1, keepdims=True)
        e = jnp.exp(logits - m)                              # padded cols underflow to 0
        probs = e / jnp.sum(e, axis=-1, keepdims=True)       # exact division
        out_ref[...] = probs.astype(out_ref.dtype)           # full 128-lane store

    return kernel


# ------------------------------ parameter prep --------------------------------
def prepare_params(raw):
    """One-time conversion of PyTorch-layout weights into packed kernel slabs."""
    NEG = jnp.float32(-1e30)

    layer_slabs = []
    for (w_ih, w_hh, b_ih, b_hh) in raw["rnn_layers"]:
        H = w_hh.shape[0]
        D = w_ih.shape[1]
        w_ih_t = jnp.asarray(w_ih, jnp.float32).T            # (D, H)
        w_hh_t = jnp.asarray(w_hh, jnp.float32).T            # (H, H)
        bias = jnp.asarray(b_ih + b_hh, jnp.float32).reshape(1, H)
        pieces = [w_ih_t, w_hh_t, bias]
        pad = (-(D + H + 1)) % 8                             # sublane-align the slab
        if pad:
            pieces.append(jnp.zeros((pad, H), jnp.float32))
        layer_slabs.append(jnp.concatenate(pieces, axis=0))

    w_fc = jnp.asarray(raw["w_fc"], jnp.float32)             # (O, H)
    b_fc = jnp.asarray(raw["b_fc"], jnp.float32)             # (O,)
    O, H = w_fc.shape
    o_pad = max(128, ((O + 127) // 128) * 128)               # lane-dense output width
    w_fc_pad = jnp.zeros((H, o_pad), jnp.float32).at[:, :O].set(w_fc.T)
    b_fc_pad = jnp.full((1, o_pad), -1e30, jnp.float32).at[0, :O].set(b_fc)
    pieces = [w_fc_pad, b_fc_pad]
    pad = (-(H + 1)) % 8
    if pad:
        pieces.append(jnp.zeros((pad, o_pad), jnp.float32))
    fc_slab = jnp.concatenate(pieces, axis=0)

    # TODO(synk): for large H, store the weight slabs in bf16 (keep f32 accumulation
    # and f32 tanh/softmax) to halve DMA bytes; kept f32 here so results match the
    # f32 reference tightly at these toy sizes.
    del NEG
    return {"layer_slabs": tuple(layer_slabs), "fc_slab": fc_slab}


def _pick_batch_tile(B):
    """Largest power-of-two batch chunk <= 8 dividing B. One chunk per grid step
    so the 'parallel' axis can spread chunks across TensorCores (v7x)."""
    for bt in (8, 4, 2, 1):
        if B % bt == 0:
            return bt
    return B


# ------------------------------- full forward ---------------------------------
@partial(jax.jit, static_argnames=("output_size",))
def autoregressive_rnn_forward(x_btd, params, *, output_size):
    """x_btd: (B, T, input_size), batch-first like PyTorch.
    Returns (out, hidden_n): out (B, T, output_size), hidden_n (n_layers, B, H)."""
    B, T, D0 = x_btd.shape
    layer_slabs = params["layer_slabs"]
    fc_slab = params["fc_slab"]
    n_layers = len(layer_slabs)
    H = layer_slabs[0].shape[1]
    O_pad = fc_slab.shape[1]
    dims_in = tuple(D0 if l == 0 else H for l in range(n_layers))

    bt = _pick_batch_tile(B)
    nc = B // bt

    # Layout plumbing (fused under jit): batch chunks, time-major inside a chunk.
    x_k = (x_btd.astype(jnp.float32)
           .reshape(nc, bt, T, D0)
           .transpose(0, 2, 1, 3)
           .reshape(nc, T * bt, D0))

    in_specs = [pl.BlockSpec((None, T * bt, D0), lambda c: (c, 0, 0))]
    args = [x_k]
    for slab in layer_slabs:
        in_specs.append(pl.BlockSpec(slab.shape, lambda c: (0, 0)))
        args.append(slab)
    in_specs.append(pl.BlockSpec(fc_slab.shape, lambda c: (0, 0)))
    args.append(fc_slab)

    out_pad, hid_k = pl.pallas_call(
        _make_fused_kernel(n_layers, dims_in, bt, T, H, O_pad),
        grid=(nc,),
        in_specs=in_specs,
        out_specs=(pl.BlockSpec((None, T * bt, O_pad), lambda c: (c, 0, 0)),
                   pl.BlockSpec((None, n_layers * bt, H), lambda c: (c, 0, 0))),
        out_shape=(jax.ShapeDtypeStruct((nc, T * bt, O_pad), jnp.float32),
                   jax.ShapeDtypeStruct((nc, n_layers * bt, H), jnp.float32)),
        compiler_params=pltpu.CompilerParams(
            dimension_semantics=("parallel",)),   # batch chunks are independent
    )(*args)

    # Undo layout: drop lane padding, back to batch-first.
    out = (out_pad.reshape(nc, T, bt, O_pad)[..., :output_size]
           .transpose(0, 2, 1, 3)
           .reshape(B, T, output_size))
    hidden_n = (hid_k.reshape(nc, n_layers, bt, H)
                .transpose(1, 0, 2, 3)
                .reshape(n_layers, B, H))
    return out, hidden_n


# --------------------------- pure-JAX reference --------------------------------
def reference_forward(x_btd, raw):
    x = jnp.transpose(x_btd, (1, 0, 2)).astype(jnp.float32)  # (T, B, D)
    finals = []
    h_seq = x
    for (w_ih, w_hh, b_ih, b_hh) in raw["rnn_layers"]:
        B = x.shape[1]
        H = w_hh.shape[0]

        def step(h_prev, x_t, w_ih=w_ih, w_hh=w_hh, b_ih=b_ih, b_hh=b_hh):
            h_new = jnp.tanh(x_t @ w_ih.T + b_ih + h_prev @ w_hh.T + b_hh)
            return h_new, h_new

        h_last, h_seq = lax.scan(step, jnp.zeros((B, H), jnp.float32), h_seq)
        finals.append(h_last)
    hidden_n = jnp.stack(finals, axis=0)
    z = jnp.maximum(h_seq, 0.0) @ raw["w_fc"].T + raw["b_fc"]
    out = jax.nn.softmax(z, axis=-1)
    return jnp.transpose(out, (1, 0, 2)), hidden_n


# ----------------------------------- main --------------------------------------
if __name__ == "__main__":
    # Model config (vanilla tanh-RNN path of the PyTorch module)
    input_size, output_size, hidden_dim, n_layers = 16, 8, 32, 2
    B, T = 2, 8

    key = jax.random.PRNGKey(0)
    keys = jax.random.split(key, 4 * n_layers + 3)
    bound = 1.0 / np.sqrt(hidden_dim)

    rnn_layers = []
    ki = 0
    for layer in range(n_layers):
        d_in = input_size if layer == 0 else hidden_dim
        w_ih = jax.random.uniform(keys[ki], (hidden_dim, d_in),
                                  minval=-bound, maxval=bound); ki += 1
        w_hh = jax.random.uniform(keys[ki], (hidden_dim, hidden_dim),
                                  minval=-bound, maxval=bound); ki += 1
        b_ih = jax.random.uniform(keys[ki], (hidden_dim,),
                                  minval=-bound, maxval=bound); ki += 1
        b_hh = jax.random.uniform(keys[ki], (hidden_dim,),
                                  minval=-bound, maxval=bound); ki += 1
        rnn_layers.append((w_ih, w_hh, b_ih, b_hh))

    w_fc = jax.random.uniform(keys[ki], (output_size, hidden_dim),
                              minval=-bound, maxval=bound); ki += 1
    b_fc = jax.random.uniform(keys[ki], (output_size,),
                              minval=-bound, maxval=bound); ki += 1
    raw_params = {"rnn_layers": rnn_layers, "w_fc": w_fc, "b_fc": b_fc}

    x = jax.random.normal(keys[ki], (B, T, input_size), dtype=jnp.float32)

    kernel_params = prepare_params(raw_params)   # one-time packing/transposition

    out, hidden_n = autoregressive_rnn_forward(x, kernel_params,
                                               output_size=output_size)
    out = jax.block_until_ready(out)
    hidden_n = jax.block_until_ready(hidden_n)

    ref_out, ref_hidden = reference_forward(x, raw_params)

    assert out.shape == (B, T, output_size)
    assert hidden_n.shape == (n_layers, B, hidden_dim)
    assert jnp.allclose(hidden_n, ref_hidden, atol=1e-4), "hidden mismatch vs reference"
    assert jnp.allclose(out, ref_out, atol=2e-4), "output mismatch vs reference"

    print("KERNEL_OK")
</pallas_src>

<mosaic_0001>
module attributes {stable_mosaic.version = 11 : i64} {
  func.func @kernel(%arg0: i32, %arg1: memref<1x16x16xf32, #tpu.memory_space<vmem>>, %arg2: memref<56x32xf32, #tpu.memory_space<vmem>>, %arg3: memref<72x32xf32, #tpu.memory_space<vmem>>, %arg4: memref<40x128xf32, #tpu.memory_space<vmem>>, %arg5: memref<1x16x128xf32, #tpu.memory_space<vmem>>, %arg6: memref<1x4x32xf32, #tpu.memory_space<vmem>>) attributes {dimension_semantics = [#tpu.dimension_semantics<parallel>], iteration_bounds = array<i64: 1>, scalar_prefetch = 0 : i64, scratch_operands = 0 : i64, tpu.core_type = #tpu.core_type<tc>, window_params = [{transform_indices = @transform_0, window_bounds = array<i64: 1, 16, 16>}, {pipeline_mode = #tpu.pipeline_mode<synchronous>, transform_indices = @transform_1, window_bounds = array<i64: 56, 32>}, {pipeline_mode = #tpu.pipeline_mode<synchronous>, transform_indices = @transform_2, window_bounds = array<i64: 72, 32>}, {pipeline_mode = #tpu.pipeline_mode<synchronous>, transform_indices = @transform_3, window_bounds = array<i64: 40, 128>}, {transform_indices = @transform_4, window_bounds = array<i64: 1, 16, 128>}, {transform_indices = @transform_5, window_bounds = array<i64: 1, 4, 32>}]} {
    %c0 = arith.constant 0 : index
    %c0_0 = arith.constant 0 : index
    %c0_1 = arith.constant 0 : index
    %0 = vector.load %arg1[%c0, %c0_0, %c0_1] : memref<1x16x16xf32, #tpu.memory_space<vmem>>, vector<1x16x16xf32>
    %1 = vector.shape_cast %0 : vector<1x16x16xf32> to vector<16x16xf32>
    %c0_2 = arith.constant 0 : index
    %c0_3 = arith.constant 0 : index
    %2 = vector.load %arg2[%c0_2, %c0_3] : memref<56x32xf32, #tpu.memory_space<vmem>>, vector<16x32xf32>
    %c16 = arith.constant 16 : index
    %c0_4 = arith.constant 0 : index
    %3 = vector.load %arg2[%c16, %c0_4] : memref<56x32xf32, #tpu.memory_space<vmem>>, vector<32x32xf32>
    %c48 = arith.constant 48 : index
    %c0_5 = arith.constant 0 : index
    %4 = vector.load %arg2[%c48, %c0_5] : memref<56x32xf32, #tpu.memory_space<vmem>>, vector<1x32xf32>
    %cst = arith.constant dense<0.000000e+00> : vector<16x32xf32>
    %5 = tpu.matmul %1, %2, %cst {dimension_numbers = #tpu.dot_dimension_numbers<[1], [0], [0], [1], [0, 0, 1, 1], [], []>} : vector<16x16xf32>, vector<16x32xf32>, vector<16x32xf32> -> vector<16x32xf32>
    %6 = vector.broadcast %4 : vector<1x32xf32> to vector<16x32xf32>
    %7 = arith.addf %5, %6 : vector<16x32xf32>
    %cst_6 = arith.constant 0.000000e+00 : f32
    %8 = vector.broadcast %cst_6 : f32 to vector<2x32xf32>
    %9 = vector.extract_strided_slice %7 {offsets = [0, 0], sizes = [2, 32], strides = [1, 1]} : vector<16x32xf32> to vector<2x32xf32>
    %cst_7 = arith.constant dense<0.000000e+00> : vector<2x32xf32>
    %10 = tpu.matmul %8, %3, %cst_7 {dimension_numbers = #tpu.dot_dimension_numbers<[1], [0], [0], [1], [0, 0, 1, 1], [], []>} : vector<2x32xf32>, vector<32x32xf32>, vector<2x32xf32> -> vector<2x32xf32>
    %11 = arith.addf %9, %10 : vector<2x32xf32>
    %12 = math.tanh %11 : vector<2x32xf32>
    %13 = vector.extract_strided_slice %7 {offsets = [2, 0], sizes = [2, 32], strides = [1, 1]} : vector<16x32xf32> to vector<2x32xf32>
    %cst_8 = arith.constant dense<0.000000e+00> : vector<2x32xf32>
    %14 = tpu.matmul %12, %3, %cst_8 {dimension_numbers = #tpu.dot_dimension_numbers<[1], [0], [0], [1], [0, 0, 1, 1], [], []>} : vector<2x32xf32>, vector<32x32xf32>, vector<2x32xf32> -> vector<2x32xf32>
    %15 = arith.addf %13, %14 : vector<2x32xf32>
    %16 = math.tanh %15 : vector<2x32xf32>
    %17 = vector.extract_strided_slice %7 {offsets = [4, 0], sizes = [2, 32], strides = [1, 1]} : vector<16x32xf32> to vector<2x32xf32>
    %cst_9 = arith.constant dense<0.000000e+00> : vector<2x32xf32>
    %18 = tpu.matmul %16, %3, %cst_9 {dimension_numbers = #tpu.dot_dimension_numbers<[1], [0], [0], [1], [0, 0, 1, 1], [], []>} : vector<2x32xf32>, vector<32x32xf32>, vector<2x32xf32> -> vector<2x32xf32>
    %19 = arith.addf %17, %18 : vector<2x32xf32>
    %20 = math.tanh %19 : vector<2x32xf32>
    %21 = vector.extract_strided_slice %7 {offsets = [6, 0], sizes = [2, 32], strides = [1, 1]} : vector<16x32xf32> to vector<2x32xf32>
    %cst_10 = arith.constant dense<0.000000e+00> : vector<2x32xf32>
    %22 = tpu.matmul %20, %3, %cst_10 {dimension_numbers = #tpu.dot_dimension_numbers<[1], [0], [0], [1], [0, 0, 1, 1], [], []>} : vector<2x32xf32>, vector<32x32xf32>, vector<2x32xf32> -> vector<2x32xf32>
    %23 = arith.addf %21, %22 : vector<2x32xf32>
    %24 = math.tanh %23 : vector<2x32xf32>
    %25 = vector.extract_strided_slice %7 {offsets = [8, 0], sizes = [2, 32], strides = [1, 1]} : vector<16x32xf32> to vector<2x32xf32>
    %cst_11 = arith.constant dense<0.000000e+00> : vector<2x32xf32>
    %26 = tpu.matmul %24, %3, %cst_11 {dimension_numbers = #tpu.dot_dimension_numbers<[1], [0], [0], [1], [0, 0, 1, 1], [], []>} : vector<2x32xf32>, vector<32x32xf32>, vector<2x32xf32> -> vector<2x32xf32>
    %27 = arith.addf %25, %26 : vector<2x32xf32>
    %28 = math.tanh %27 : vector<2x32xf32>
    %29 = vector.extract_strided_slice %7 {offsets = [10, 0], sizes = [2, 32], strides = [1, 1]} : vector<16x32xf32> to vector<2x32xf32>
    %cst_12 = arith.constant dense<0.000000e+00> : vector<2x32xf32>
    %30 = tpu.matmul %28, %3, %cst_12 {dimension_numbers = #tpu.dot_dimension_numbers<[1], [0], [0], [1], [0, 0, 1, 1], [], []>} : vector<2x32xf32>, vector<32x32xf32>, vector<2x32xf32> -> vector<2x32xf32>
    %31 = arith.addf %29, %30 : vector<2x32xf32>
    %32 = math.tanh %31 : vector<2x32xf32>
    %33 = vector.extract_strided_slice %7 {offsets = [12, 0], sizes = [2, 32], strides = [1, 1]} : vector<16x32xf32> to vector<2x32xf32>
    %cst_13 = arith.constant dense<0.000000e+00> : vector<2x32xf32>
    %34 = tpu.matmul %32, %3, %cst_13 {dimension_numbers = #tpu.dot_dimension_numbers<[1], [0], [0], [1], [0, 0, 1, 1], [], []>} : vector<2x32xf32>, vector<32x32xf32>, vector<2x32xf32> -> vector<2x32xf32>
    %35 = arith.addf %33, %34 : vector<2x32xf32>
    %36 = math.tanh %35 : vector<2x32xf32>
    %37 = vector.extract_strided_slice %7 {offsets = [14, 0], sizes = [2, 32], strides = [1, 1]} : vector<16x32xf32> to vector<2x32xf32>
    %cst_14 = arith.constant dense<0.000000e+00> : vector<2x32xf32>
    %38 = tpu.matmul %36, %3, %cst_14 {dimension_numbers = #tpu.dot_dimension_numbers<[1], [0], [0], [1], [0, 0, 1, 1], [], []>} : vector<2x32xf32>, vector<32x32xf32>, vector<2x32xf32> -> vector<2x32xf32>
    %39 = arith.addf %37, %38 : vector<2x32xf32>
    %40 = math.tanh %39 : vector<2x32xf32>
    %41 = tpu.concatenate %12, %16, %20, %24, %28, %32, %36, %40 in 0 : vector<2x32xf32>, vector<2x32xf32>, vector<2x32xf32>, vector<2x32xf32>, vector<2x32xf32>, vector<2x32xf32>, vector<2x32xf32>, vector<2x32xf32> -> vector<16x32xf32>
    %c0_15 = arith.constant 0 : index
    %c0_16 = arith.constant 0 : index
    %42 = vector.load %arg3[%c0_15, %c0_16] : memref<72x32xf32, #tpu.memory_space<vmem>>, vector<32x32xf32>
    %c32 = arith.constant 32 : index
    %c0_17 = arith.constant 0 : index
    %43 = vector.load %arg3[%c32, %c0_17] : memref<72x32xf32, #tpu.memory_space<vmem>>, vector<32x32xf32>
    %c64 = arith.constant 64 : index
    %c0_18 = arith.constant 0 : index
    %44 = vector.load %arg3[%c64, %c0_18] : memref<72x32xf32, #tpu.memory_space<vmem>>, vector<1x32xf32>
    %cst_19 = arith.constant dense<0.000000e+00> : vector<16x32xf32>
    %45 = tpu.matmul %41, %42, %cst_19 {dimension_numbers = #tpu.dot_dimension_numbers<[1], [0], [0], [1], [0, 0, 1, 1], [], []>} : vector<16x32xf32>, vector<32x32xf32>, vector<16x32xf32> -> vector<16x32xf32>
    %46 = vector.broadcast %44 : vector<1x32xf32> to vector<16x32xf32>
    %47 = arith.addf %45, %46 : vector<16x32xf32>
    %cst_20 = arith.constant 0.000000e+00 : f32
    %48 = vector.broadcast %cst_20 : f32 to vector<2x32xf32>
    %49 = vector.extract_strided_slice %47 {offsets = [0, 0], sizes = [2, 32], strides = [1, 1]} : vector<16x32xf32> to vector<2x32xf32>
    %cst_21 = arith.constant dense<0.000000e+00> : vector<2x32xf32>
    %50 = tpu.matmul %48, %43, %cst_21 {dimension_numbers = #tpu.dot_dimension_numbers<[1], [0], [0], [1], [0, 0, 1, 1], [], []>} : vector<2x32xf32>, vector<32x32xf32>, vector<2x32xf32> -> vector<2x32xf32>
    %51 = arith.addf %49, %50 : vector<2x32xf32>
    %52 = math.tanh %51 : vector<2x32xf32>
    %53 = vector.extract_strided_slice %47 {offsets = [2, 0], sizes = [2, 32], strides = [1, 1]} : vector<16x32xf32> to vector<2x32xf32>
    %cst_22 = arith.constant dense<0.000000e+00> : vector<2x32xf32>
    %54 = tpu.matmul %52, %43, %cst_22 {dimension_numbers = #tpu.dot_dimension_numbers<[1], [0], [0], [1], [0, 0, 1, 1], [], []>} : vector<2x32xf32>, vector<32x32xf32>, vector<2x32xf32> -> vector<2x32xf32>
    %55 = arith.addf %53, %54 : vector<2x32xf32>
    %56 = math.tanh %55 : vector<2x32xf32>
    %57 = vector.extract_strided_slice %47 {offsets = [4, 0], sizes = [2, 32], strides = [1, 1]} : vector<16x32xf32> to vector<2x32xf32>
    %cst_23 = arith.constant dense<0.000000e+00> : vector<2x32xf32>
    %58 = tpu.matmul %56, %43, %cst_23 {dimension_numbers = #tpu.dot_dimension_numbers<[1], [0], [0], [1], [0, 0, 1, 1], [], []>} : vector<2x32xf32>, vector<32x32xf32>, vector<2x32xf32> -> vector<2x32xf32>
    %59 = arith.addf %57, %58 : vector<2x32xf32>
    %60 = math.tanh %59 : vector<2x32xf32>
    %61 = vector.extract_strided_slice %47 {offsets = [6, 0], sizes = [2, 32], strides = [1, 1]} : vector<16x32xf32> to vector<2x32xf32>
    %cst_24 = arith.constant dense<0.000000e+00> : vector<2x32xf32>
    %62 = tpu.matmul %60, %43, %cst_24 {dimension_numbers = #tpu.dot_dimension_numbers<[1], [0], [0], [1], [0, 0, 1, 1], [], []>} : vector<2x32xf32>, vector<32x32xf32>, vector<2x32xf32> -> vector<2x32xf32>
    %63 = arith.addf %61, %62 : vector<2x32xf32>
    %64 = math.tanh %63 : vector<2x32xf32>
    %65 = vector.extract_strided_slice %47 {offsets = [8, 0], sizes = [2, 32], strides = [1, 1]} : vector<16x32xf32> to vector<2x32xf32>
    %cst_25 = arith.constant dense<0.000000e+00> : vector<2x32xf32>
    %66 = tpu.matmul %64, %43, %cst_25 {dimension_numbers = #tpu.dot_dimension_numbers<[1], [0], [0], [1], [0, 0, 1, 1], [], []>} : vector<2x32xf32>, vector<32x32xf32>, vector<2x32xf32> -> vector<2x32xf32>
    %67 = arith.addf %65, %66 : vector<2x32xf32>
    %68 = math.tanh %67 : vector<2x32xf32>
    %69 = vector.extract_strided_slice %47 {offsets = [10, 0], sizes = [2, 32], strides = [1, 1]} : vector<16x32xf32> to vector<2x32xf32>
    %cst_26 = arith.constant dense<0.000000e+00> : vector<2x32xf32>
    %70 = tpu.matmul %68, %43, %cst_26 {dimension_numbers = #tpu.dot_dimension_numbers<[1], [0], [0], [1], [0, 0, 1, 1], [], []>} : vector<2x32xf32>, vector<32x32xf32>, vector<2x32xf32> -> vector<2x32xf32>
    %71 = arith.addf %69, %70 : vector<2x32xf32>
    %72 = math.tanh %71 : vector<2x32xf32>
    %73 = vector.extract_strided_slice %47 {offsets = [12, 0], sizes = [2, 32], strides = [1, 1]} : vector<16x32xf32> to vector<2x32xf32>
    %cst_27 = arith.constant dense<0.000000e+00> : vector<2x32xf32>
    %74 = tpu.matmul %72, %43, %cst_27 {dimension_numbers = #tpu.dot_dimension_numbers<[1], [0], [0], [1], [0, 0, 1, 1], [], []>} : vector<2x32xf32>, vector<32x32xf32>, vector<2x32xf32> -> vector<2x32xf32>
    %75 = arith.addf %73, %74 : vector<2x32xf32>
    %76 = math.tanh %75 : vector<2x32xf32>
    %77 = vector.extract_strided_slice %47 {offsets = [14, 0], sizes = [2, 32], strides = [1, 1]} : vector<16x32xf32> to vector<2x32xf32>
    %cst_28 = arith.constant dense<0.000000e+00> : vector<2x32xf32>
    %78 = tpu.matmul %76, %43, %cst_28 {dimension_numbers = #tpu.dot_dimension_numbers<[1], [0], [0], [1], [0, 0, 1, 1], [], []>} : vector<2x32xf32>, vector<32x32xf32>, vector<2x32xf32> -> vector<2x32xf32>
    %79 = arith.addf %77, %78 : vector<2x32xf32>
    %80 = math.tanh %79 : vector<2x32xf32>
    %81 = tpu.concatenate %52, %56, %60, %64, %68, %72, %76, %80 in 0 : vector<2x32xf32>, vector<2x32xf32>, vector<2x32xf32>, vector<2x32xf32>, vector<2x32xf32>, vector<2x32xf32>, vector<2x32xf32>, vector<2x32xf32> -> vector<16x32xf32>
    %82 = tpu.concatenate %40, %80 in 0 : vector<2x32xf32>, vector<2x32xf32> -> vector<4x32xf32>
    %c0_29 = arith.constant 0 : index
    %c0_30 = arith.constant 0 : index
    %c0_31 = arith.constant 0 : index
    %83 = vector.load %arg6[%c0_29, %c0_30, %c0_31] : memref<1x4x32xf32, #tpu.memory_space<vmem>>, vector<1x4x32xf32>
    %84 = vector.shape_cast %83 : vector<1x4x32xf32> to vector<4x32xf32>
    %85 = vector.shape_cast %82 : vector<4x32xf32> to vector<1x4x32xf32>
    tpu.vector_store %arg6[%c0_29, %c0_30, %c0_31], %85 {strides = array<i32>} : memref<1x4x32xf32, #tpu.memory_space<vmem>>, vector<1x4x32xf32>,
    %c0_32 = arith.constant 0 : index
    %c0_33 = arith.constant 0 : index
    %86 = vector.load %arg4[%c0_32, %c0_33] : memref<40x128xf32, #tpu.memory_space<vmem>>, vector<32x128xf32>
    %c32_34 = arith.constant 32 : index
    %c0_35 = arith.constant 0 : index
    %87 = vector.load %arg4[%c32_34, %c0_35] : memref<40x128xf32, #tpu.memory_space<vmem>>, vector<1x128xf32>
    %cst_36 = arith.constant 0.000000e+00 : f32
    %88 = vector.broadcast %cst_36 : f32 to vector<16x32xf32>
    %89 = arith.maximumf %81, %88 : vector<16x32xf32>
    %cst_37 = arith.constant dense<0.000000e+00> : vector<16x128xf32>
    %90 = tpu.matmul %89, %86, %cst_37 {dimension_numbers = #tpu.dot_dimension_numbers<[1], [0], [0], [1], [0, 0, 1, 1], [], []>} : vector<16x32xf32>, vector<32x128xf32>, vector<16x128xf32> -> vector<16x128xf32>
    %91 = vector.broadcast %87 : vector<1x128xf32> to vector<16x128xf32>
    %92 = arith.addf %90, %91 : vector<16x128xf32>
    %cst_38 = arith.constant dense<0xFF800000> : vector<16xf32>
    %93 = vector.multi_reduction <maximumf>, %92, %cst_38 [1] : vector<16x128xf32> to vector<16xf32>
    %94 = vector.shape_cast %93 : vector<16xf32> to vector<16x1xf32>
    %95 = vector.broadcast %94 : vector<16x1xf32> to vector<16x128xf32>
    %96 = arith.subf %92, %95 : vector<16x128xf32>
    %97 = math.exp %96 : vector<16x128xf32>
    %cst_39 = arith.constant dense<0.000000e+00> : vector<16xf32>
    %98 = vector.multi_reduction <add>, %97, %cst_39 [1] : vector<16x128xf32> to vector<16xf32>
    %99 = vector.shape_cast %98 : vector<16xf32> to vector<16x1xf32>
    %100 = vector.broadcast %99 : vector<16x1xf32> to vector<16x128xf32>
    %101 = arith.divf %97, %100 : vector<16x128xf32>
    %c0_40 = arith.constant 0 : index
    %c0_41 = arith.constant 0 : index
    %c0_42 = arith.constant 0 : index
    %102 = vector.load %arg5[%c0_40, %c0_41, %c0_42] : memref<1x16x128xf32, #tpu.memory_space<vmem>>, vector<1x16x128xf32>
    %103 = vector.shape_cast %102 : vector<1x16x128xf32> to vector<16x128xf32>
    %104 = vector.shape_cast %101 : vector<16x128xf32> to vector<1x16x128xf32>
    tpu.vector_store %arg5[%c0_40, %c0_41, %c0_42], %104 {strides = array<i32>} : memref<1x16x128xf32, #tpu.memory_space<vmem>>, vector<1x16x128xf32>,
    return
  }
  func.func @transform_0(%arg0: i32) -> (i32, i32, i32) {
    %c0_i32 = arith.constant 0 : i32
    %c0_i32_0 = arith.constant 0 : i32
    %c0_i32_1 = arith.constant 0 : i32
    return %arg0, %c0_i32, %c0_i32_0 : i32, i32, i32
  }
  func.func @transform_1(%arg0: i32) -> (i32, i32) {
    %c0_i32 = arith.constant 0 : i32
    %c0_i32_0 = arith.constant 0 : i32
    %c0_i32_1 = arith.constant 0 : i32
    return %c0_i32, %c0_i32_0 : i32, i32
  }
  func.func @transform_2(%arg0: i32) -> (i32, i32) {
    %c0_i32 = arith.constant 0 : i32
    %c0_i32_0 = arith.constant 0 : i32
    %c0_i32_1 = arith.constant 0 : i32
    return %c0_i32, %c0_i32_0 : i32, i32
  }
  func.func @transform_3(%arg0: i32) -> (i32, i32) {
    %c0_i32 = arith.constant 0 : i32
    %c0_i32_0 = arith.constant 0 : i32
    %c0_i32_1 = arith.constant 0 : i32
    return %c0_i32, %c0_i32_0 : i32, i32
  }
  func.func @transform_4(%arg0: i32) -> (i32, i32, i32) {
    %c0_i32 = arith.constant 0 : i32
    %c0_i32_0 = arith.constant 0 : i32
    %c0_i32_1 = arith.constant 0 : i32
    return %arg0, %c0_i32, %c0_i32_0 : i32, i32, i32
  }
  func.func @transform_5(%arg0: i32) -> (i32, i32, i32) {
    %c0_i32 = arith.constant 0 : i32
    %c0_i32_0 = arith.constant 0 : i32
    %c0_i32_1 = arith.constant 0 : i32
    return %arg0, %c0_i32, %c0_i32_0 : i32, i32, i32
  }
}

</mosaic_0001>

<llo_original>
// kernel: autoregressive_rnn_forward.1
$region0: #{autoregressive_rnn_forward.1}
  #allocation0 [shape = 'u32[]', space=smem, size = 0x4, offset = 0x4, fixed_abs, tag = 'smem constant byte address 0x4 - core index']
  #allocation1 [shape = 'u32[72,128]{1,0:T(1,128)}', space=vmem, size = 0x9000, scoped, tag = 'internal scratch']
  %s0 = inlined_call_operand.vmem [shape: f32[1,16,16], index: 0, kind: input, shape index: {}]
  %s1 = inlined_call_operand.vmem [shape: f32[56,32], index: 1, kind: input, shape index: {}]
  %s2 = inlined_call_operand.vmem [shape: f32[72,32], index: 2, kind: input, shape index: {}]
  %s3 = inlined_call_operand.vmem [shape: f32[40,128], index: 3, kind: input, shape index: {}]
  %s4 = inlined_call_operand.vmem [shape: f32[1,16,128], index: 4, kind: output, shape index: {0}]
  %s5 = inlined_call_operand.hbm [shape: f32[1,4,32], index: 5, kind: output, shape index: {1}]
  %6 = xla_tuple %s4, %s5
  %s7 = sld [smem:[#allocation0]]
  $region34: #{autoregressive_rnn_forward.1} parent=0
    _
  %s9 = ssub.s32 1, %s7
  %s10 = scalar_select 0, %s9, %s7
  $region1: #{autoregressive_rnn_forward.1} parent=0
    #allocation2 [shape = 'u8[2048]{0}', space=vmem, size = 0x800, scoped, tag = 'output window, operand 1, single buffered']
    #allocation3 [shape = 's32[1]{0}', space=sflag, size = 0x4, scoped, tag = 'scoped memory for autoregressive_rnn_forward.1']
    %11 = vsyncpa [#allocation3], 0
    // Predicated region
    $region2: #{autoregressive_rnn_forward.1} parent=1 // pred_check
      _
    $region3: #{autoregressive_rnn_forward.1} parent=1 // pred_check_branch
      %13 = sbr.rel (0) target = $region5
    $region4: #{autoregressive_rnn_forward.1} parent=1 // pred_region
      _
    $region5: #{autoregressive_rnn_forward.1} parent=1 // pred_fallthru
      _
    // Predicated region
    $region6: #{autoregressive_rnn_forward.1} parent=1 // pred_check
      _
    $region7: #{autoregressive_rnn_forward.1} parent=1 // pred_check_branch
      %15 = sbr.rel (0) target = $region9
    $region8: #{autoregressive_rnn_forward.1} parent=1 // pred_region
      _
    $region9: #{autoregressive_rnn_forward.1} parent=1 // pred_fallthru
      _
    // Predicated region
    $region10: #{autoregressive_rnn_forward.1} parent=1 // pred_check
      _
    $region11: #{autoregressive_rnn_forward.1} parent=1 // pred_check_branch
      %17 = sbr.rel (0) target = $region13
    $region12: #{autoregressive_rnn_forward.1} parent=1 // pred_region
      _
    $region13: #{autoregressive_rnn_forward.1} parent=1 // pred_fallthru
      _
    // Predicated region
    $region14: #{autoregressive_rnn_forward.1} parent=1 // pred_check
      _
    $region15: #{autoregressive_rnn_forward.1} parent=1 // pred_check_branch
      %19 = sbr.rel (0) target = $region17
    $region16: #{autoregressive_rnn_forward.1} parent=1 // pred_region
      _
    $region17: #{autoregressive_rnn_forward.1} parent=1 // pred_fallthru
      _
    %v20 = vld [vmem:[%s0] sm:$0xff]
    %v21 = vld [vmem:[%s0 + $0x8] sm:$0xff]
    %v22 = vld [vmem:[%s1] sm:$0xff]
    %v23 = vld [vmem:[%s1 + $0x8] sm:$0xff]
    %v24 = vld [vmem:[%s1 + $0x10] sm:$0xff]
    %v25 = vld [vmem:[%s1 + $0x18] sm:$0xff]
    %v26 = vld [vmem:[%s1 + $0x20] sm:$0xff]
    %v27 = vld [vmem:[%s1 + $0x28] sm:$0xff]
    %v28 = vld [vmem:[%s1 + $0x30] sm:$0x1]
    %v29 = vperm.slane %v28, 0
    %vm30 = vcmask 130048
    %v32 = vsel %vm30, %v20, 0
    %v35 = vsel %vm30, %v21, 0
    %37 = vmatpush.msra.mxu0 0.0
    %38 = vmatpush.msra.mxu0 0.0
    %39 = vmatpush.msra.mxu0 0.0
    %40 = vmatpush.msra.mxu0 0.0
    %41 = vmatpush.msra.mxu0 0.0
    %42 = vmatpush.msra.mxu0 0.0
    %43 = vmatpush.msra.mxu0 0.0
    %44 = vmatpush.msra.mxu0 0.0
    %45 = vmatpush.msra.mxu0 0.0
    %46 = vmatpush.msra.mxu0 0.0
    %47 = vmatpush.msra.mxu0 0.0
    %48 = vmatpush.msra.mxu0 0.0
    %49 = vmatpush.msra.mxu0 0.0
    %50 = vmatpush.msra.mxu0 0.0
    %51 = vmatpush.msra.mxu0 %v23
    %52 = vmatpush.msra.mxu0 %v22
    %53 = vmatmul.f32.gmra.mxu0 %v32
    %v54 = vpop.f32.mrf.mxu0
    %v55 = vadd.f32 %v29, %v54
    %56 = vmatmul.f32.gmra.mxu0 %v35
    %v57 = vpop.f32.mrf.mxu0
    %v58 = vadd.f32 %v29, %v57
    %59 = vdwg.mxu0
    %vm60 = vcmask 261120
    %v62 = vsel %vm60, 0.0, 0
    %64 = vmatpush.msra.mxu0 0.0
    %65 = vmatpush.msra.mxu0 0.0
    %66 = vmatpush.msra.mxu0 0.0
    %67 = vmatpush.msra.mxu0 0.0
    %68 = vmatpush.msra.mxu0 0.0
    %69 = vmatpush.msra.mxu0 0.0
    %70 = vmatpush.msra.mxu0 0.0
    %71 = vmatpush.msra.mxu0 0.0
    %72 = vmatpush.msra.mxu0 0.0
    %73 = vmatpush.msra.mxu0 0.0
    %74 = vmatpush.msra.mxu0 0.0
    %75 = vmatpush.msra.mxu0 0.0
    %76 = vmatpush.msra.mxu0 %v27
    %77 = vmatpush.msra.mxu0 %v26
    %78 = vmatpush.msra.mxu0 %v25
    %79 = vmatpush.msra.mxu0 %v24
    %80 = vmatmul.f32.gmra.mxu0 %v62
    %v81 = vpop.f32.mrf.mxu0
    %v82 = vadd.f32 0.0, %v81
    %83 = vdwg.mxu0
    %v84 = vadd.f32 %v55, %v82
    %v85 = vtanh.pop %v84
    %v87 = vsel %vm60, %v85, 0
    %89 = vmatpush.msra.mxu0 0.0
    %90 = vmatpush.msra.mxu0 0.0
    %91 = vmatpush.msra.mxu0 0.0
    %92 = vmatpush.msra.mxu0 0.0
    %93 = vmatpush.msra.mxu0 0.0
    %94 = vmatpush.msra.mxu0 0.0
    %95 = vmatpush.msra.mxu0 0.0
    %96 = vmatpush.msra.mxu0 0.0
    %97 = vmatpush.msra.mxu0 0.0
    %98 = vmatpush.msra.mxu0 0.0
    %99 = vmatpush.msra.mxu0 0.0
    %100 = vmatpush.msra.mxu0 0.0
    %101 = vmatpush.msra.mxu0 %v27
    %102 = vmatpush.msra.mxu0 %v26
    %103 = vmatpush.msra.mxu0 %v25
    %104 = vmatpush.msra.mxu0 %v24
    %105 = vmatmul.f32.gmra.mxu0 %v87
    %v106 = vpop.f32.mrf.mxu0
    %v107 = vadd.f32 0.0, %v106
    %108 = vdwg.mxu0
    %v110 = vrot.slane %v107, 6
    %v112 = vadd.f32 %v55, %v110
    %v113 = vtanh.pop %v112
    %v115 = vrot.slane %v113, 2
    %v116 = vsel %vm60, %v115, 0
    %118 = vmatpush.msra.mxu0 0.0
    %119 = vmatpush.msra.mxu0 0.0
    %120 = vmatpush.msra.mxu0 0.0
    %121 = vmatpush.msra.mxu0 0.0
    %122 = vmatpush.msra.mxu0 0.0
    %123 = vmatpush.msra.mxu0 0.0
    %124 = vmatpush.msra.mxu0 0.0
    %125 = vmatpush.msra.mxu0 0.0
    %126 = vmatpush.msra.mxu0 0.0
    %127 = vmatpush.msra.mxu0 0.0
    %128 = vmatpush.msra.mxu0 0.0
    %129 = vmatpush.msra.mxu0 0.0
    %130 = vmatpush.msra.mxu0 %v27
    %131 = vmatpush.msra.mxu0 %v26
    %132 = vmatpush.msra.mxu0 %v25
    %133 = vmatpush.msra.mxu0 %v24
    %134 = vmatmul.f32.gmra.mxu0 %v116
    %v135 = vpop.f32.mrf.mxu0
    %v136 = vadd.f32 0.0, %v135
    %137 = vdwg.mxu0
    %v139 = vrot.slane %v136, 4
    %v141 = vadd.f32 %v55, %v139
    %v142 = vtanh.pop %v141
    %v144 = vrot.slane %v142, 4
    %v145 = vsel %vm60, %v144, 0
    %147 = vmatpush.msra.mxu0 0.0
    %148 = vmatpush.msra.mxu0 0.0
    %149 = vmatpush.msra.mxu0 0.0
    %150 = vmatpush.msra.mxu0 0.0
    %151 = vmatpush.msra.mxu0 0.0
    %152 = vmatpush.msra.mxu0 0.0
    %153 = vmatpush.msra.mxu0 0.0
    %154 = vmatpush.msra.mxu0 0.0
    %155 = vmatpush.msra.mxu0 0.0
    %156 = vmatpush.msra.mxu0 0.0
    %157 = vmatpush.msra.mxu0 0.0
    %158 = vmatpush.msra.mxu0 0.0
    %159 = vmatpush.msra.mxu0 %v27
    %160 = vmatpush.msra.mxu0 %v26
    %161 = vmatpush.msra.mxu0 %v25
    %162 = vmatpush.msra.mxu0 %v24
    %163 = vmatmul.f32.gmra.mxu0 %v145
    %v164 = vpop.f32.mrf.mxu0
    %v165 = vadd.f32 0.0, %v164
    %166 = vdwg.mxu0
    %v168 = vrot.slane %v165, 2
    %v170 = vadd.f32 %v55, %v168
    %v171 = vtanh.pop %v170
    %v173 = vrot.slane %v171, 6
    %v174 = vsel %vm60, %v173, 0
    %176 = vmatpush.msra.mxu0 0.0
    %177 = vmatpush.msra.mxu0 0.0
    %178 = vmatpush.msra.mxu0 0.0
    %179 = vmatpush.msra.mxu0 0.0
    %180 = vmatpush.msra.mxu0 0.0
    %181 = vmatpush.msra.mxu0 0.0
    %182 = vmatpush.msra.mxu0 0.0
    %183 = vmatpush.msra.mxu0 0.0
    %184 = vmatpush.msra.mxu0 0.0
    %185 = vmatpush.msra.mxu0 0.0
    %186 = vmatpush.msra.mxu0 0.0
    %187 = vmatpush.msra.mxu0 0.0
    %188 = vmatpush.msra.mxu0 %v27
    %189 = vmatpush.msra.mxu0 %v26
    %190 = vmatpush.msra.mxu0 %v25
    %191 = vmatpush.msra.mxu0 %v24
    %192 = vmatmul.f32.gmra.mxu0 %v174
    %v193 = vpop.f32.mrf.mxu0
    %v194 = vadd.f32 0.0, %v193
    %195 = vdwg.mxu0
    %v196 = vadd.f32 %v58, %v194
    %v197 = vtanh.pop %v196
    %v199 = vsel %vm60, %v197, 0
    %201 = vmatpush.msra.mxu0 0.0
    %202 = vmatpush.msra.mxu0 0.0
    %203 = vmatpush.msra.mxu0 0.0
    %204 = vmatpush.msra.mxu0 0.0
    %205 = vmatpush.msra.mxu0 0.0
    %206 = vmatpush.msra.mxu0 0.0
    %207 = vmatpush.msra.mxu0 0.0
    %208 = vmatpush.msra.mxu0 0.0
    %209 = vmatpush.msra.mxu0 0.0
    %210 = vmatpush.msra.mxu0 0.0
    %211 = vmatpush.msra.mxu0 0.0
    %212 = vmatpush.msra.mxu0 0.0
    %213 = vmatpush.msra.mxu0 %v27
    %214 = vmatpush.msra.mxu0 %v26
    %215 = vmatpush.msra.mxu0 %v25
    %216 = vmatpush.msra.mxu0 %v24
    %217 = vmatmul.f32.gmra.mxu0 %v199
    %v218 = vpop.f32.mrf.mxu0
    %v219 = vadd.f32 0.0, %v218
    %220 = vdwg.mxu0
    %v222 = vrot.slane %v219, 6
    %v224 = vadd.f32 %v58, %v222
    %v225 = vtanh.pop %v224
    %v227 = vrot.slane %v225, 2
    %v228 = vsel %vm60, %v227, 0
    %230 = vmatpush.msra.mxu0 0.0
    %231 = vmatpush.msra.mxu0 0.0
    %232 = vmatpush.msra.mxu0 0.0
    %233 = vmatpush.msra.mxu0 0.0
    %234 = vmatpush.msra.mxu0 0.0
    %235 = vmatpush.msra.mxu0 0.0
    %236 = vmatpush.msra.mxu0 0.0
    %237 = vmatpush.msra.mxu0 0.0
    %238 = vmatpush.msra.mxu0 0.0
    %239 = vmatpush.msra.mxu0 0.0
    %240 = vmatpush.msra.mxu0 0.0
    %241 = vmatpush.msra.mxu0 0.0
    %242 = vmatpush.msra.mxu0 %v27
    %243 = vmatpush.msra.mxu0 %v26
    %244 = vmatpush.msra.mxu0 %v25
    %245 = vmatpush.msra.mxu0 %v24
    %246 = vmatmul.f32.gmra.mxu0 %v228
    %v247 = vpop.f32.mrf.mxu0
    %v248 = vadd.f32 0.0, %v247
    %249 = vdwg.mxu0
    %v251 = vrot.slane %v248, 4
    %v253 = vadd.f32 %v58, %v251
    %v254 = vtanh.pop %v253
    %v256 = vrot.slane %v254, 4
    %v257 = vsel %vm60, %v256, 0
    %259 = vmatpush.msra.mxu0 0.0
    %260 = vmatpush.msra.mxu0 0.0
    %261 = vmatpush.msra.mxu0 0.0
    %262 = vmatpush.msra.mxu0 0.0
    %263 = vmatpush.msra.mxu0 0.0
    %264 = vmatpush.msra.mxu0 0.0
    %265 = vmatpush.msra.mxu0 0.0
    %266 = vmatpush.msra.mxu0 0.0
    %267 = vmatpush.msra.mxu0 0.0
    %268 = vmatpush.msra.mxu0 0.0
    %269 = vmatpush.msra.mxu0 0.0
    %270 = vmatpush.msra.mxu0 0.0
    %271 = vmatpush.msra.mxu0 %v27
    %272 = vmatpush.msra.mxu0 %v26
    %273 = vmatpush.msra.mxu0 %v25
    %274 = vmatpush.msra.mxu0 %v24
    %275 = vmatmul.f32.gmra.mxu0 %v257
    %v276 = vpop.f32.mrf.mxu0
    %v277 = vadd.f32 0.0, %v276
    %278 = vdwg.mxu0
    %v280 = vrot.slane %v277, 2
    %v282 = vadd.f32 %v58, %v280
    %v283 = vtanh.pop %v282
    %vm284 = vcmask 1041408
    %v285 = vsel %vm284, %v85, %v113
    %vm286 = vcmask 1043456
    %v287 = vsel %vm286, %v285, %v142
    %vm288 = vcmask 1045504
    %v289 = vsel %vm288, %v287, %v171
    %v290 = vsel %vm284, %v197, %v225
    %v291 = vsel %vm286, %v290, %v254
    %v292 = vsel %vm288, %v291, %v283
    %v293 = vld [vmem:[%s2] sm:$0xff]
    %v294 = vld [vmem:[%s2 + $0x8] sm:$0xff]
    %v295 = vld [vmem:[%s2 + $0x10] sm:$0xff]
    %v296 = vld [vmem:[%s2 + $0x18] sm:$0xff]
    %v297 = vld [vmem:[%s2 + $0x20] sm:$0xff]
    %v298 = vld [vmem:[%s2 + $0x28] sm:$0xff]
    %v299 = vld [vmem:[%s2 + $0x30] sm:$0xff]
    %v300 = vld [vmem:[%s2 + $0x38] sm:$0xff]
    %v301 = vld [vmem:[%s2 + $0x40] sm:$0x1]
    %v302 = vperm.slane %v301, 0
    %v304 = vsel %vm60, %v289, 0
    %v307 = vsel %vm60, %v292, 0
    %309 = vmatpush.msra.mxu0 0.0
    %310 = vmatpush.msra.mxu0 0.0
    %311 = vmatpush.msra.mxu0 0.0
    %312 = vmatpush.msra.mxu0 0.0
    %313 = vmatpush.msra.mxu0 0.0
    %314 = vmatpush.msra.mxu0 0.0
    %315 = vmatpush.msra.mxu0 0.0
    %316 = vmatpush.msra.mxu0 0.0
    %317 = vmatpush.msra.mxu0 0.0
    %318 = vmatpush.msra.mxu0 0.0
    %319 = vmatpush.msra.mxu0 0.0
    %320 = vmatpush.msra.mxu0 0.0
    %321 = vmatpush.msra.mxu0 %v296
    %322 = vmatpush.msra.mxu0 %v295
    %323 = vmatpush.msra.mxu0 %v294
    %324 = vmatpush.msra.mxu0 %v293
    %325 = vmatmul.f32.gmra.mxu0 %v304
    %v326 = vpop.f32.mrf.mxu0
    %v327 = vadd.f32 %v302, %v326
    %328 = vmatmul.f32.gmra.mxu0 %v307
    %v329 = vpop.f32.mrf.mxu0
    %v330 = vadd.f32 %v302, %v329
    %331 = vdwg.mxu0
    %332 = vmatpush.msra.mxu0 0.0
    %333 = vmatpush.msra.mxu0 0.0
    %334 = vmatpush.msra.mxu0 0.0
    %335 = vmatpush.msra.mxu0 0.0
    %336 = vmatpush.msra.mxu0 0.0
    %337 = vmatpush.msra.mxu0 0.0
    %338 = vmatpush.msra.mxu0 0.0
    %339 = vmatpush.msra.mxu0 0.0
    %340 = vmatpush.msra.mxu0 0.0
    %341 = vmatpush.msra.mxu0 0.0
    %342 = vmatpush.msra.mxu0 0.0
    %343 = vmatpush.msra.mxu0 0.0
    %344 = vmatpush.msra.mxu0 %v300
    %345 = vmatpush.msra.mxu0 %v299
    %346 = vmatpush.msra.mxu0 %v298
    %347 = vmatpush.msra.mxu0 %v297
    %348 = vmatmul.f32.gmra.mxu0 %v62
    %v349 = vpop.f32.mrf.mxu0
    %v350 = vadd.f32 0.0, %v349
    %351 = vdwg.mxu0
    %v352 = vadd.f32 %v327, %v350
    %v353 = vtanh.pop %v352
    %v355 = vsel %vm60, %v353, 0
    %357 = vmatpush.msra.mxu0 0.0
    %358 = vmatpush.msra.mxu0 0.0
    %359 = vmatpush.msra.mxu0 0.0
    %360 = vmatpush.msra.mxu0 0.0
    %361 = vmatpush.msra.mxu0 0.0
    %362 = vmatpush.msra.mxu0 0.0
    %363 = vmatpush.msra.mxu0 0.0
    %364 = vmatpush.msra.mxu0 0.0
    %365 = vmatpush.msra.mxu0 0.0
    %366 = vmatpush.msra.mxu0 0.0
    %367 = vmatpush.msra.mxu0 0.0
    %368 = vmatpush.msra.mxu0 0.0
    %369 = vmatpush.msra.mxu0 %v300
    %370 = vmatpush.msra.mxu0 %v299
    %371 = vmatpush.msra.mxu0 %v298
    %372 = vmatpush.msra.mxu0 %v297
    %373 = vmatmul.f32.gmra.mxu0 %v355
    %v374 = vpop.f32.mrf.mxu0
    %v375 = vadd.f32 0.0, %v374
    %376 = vdwg.mxu0
    %v378 = vrot.slane %v375, 6
    %v380 = vadd.f32 %v327, %v378
    %v381 = vtanh.pop %v380
    %v383 = vrot.slane %v381, 2
    %v384 = vsel %vm60, %v383, 0
    %386 = vmatpush.msra.mxu0 0.0
    %387 = vmatpush.msra.mxu0 0.0
    %388 = vmatpush.msra.mxu0 0.0
    %389 = vmatpush.msra.mxu0 0.0
    %390 = vmatpush.msra.mxu0 0.0
    %391 = vmatpush.msra.mxu0 0.0
    %392 = vmatpush.msra.mxu0 0.0
    %393 = vmatpush.msra.mxu0 0.0
    %394 = vmatpush.msra.mxu0 0.0
    %395 = vmatpush.msra.mxu0 0.0
    %396 = vmatpush.msra.mxu0 0.0
    %397 = vmatpush.msra.mxu0 0.0
    %398 = vmatpush.msra.mxu0 %v300
    %399 = vmatpush.msra.mxu0 %v299
    %400 = vmatpush.msra.mxu0 %v298
    %401 = vmatpush.msra.mxu0 %v297
    %402 = vmatmul.f32.gmra.mxu0 %v384
    %v403 = vpop.f32.mrf.mxu0
    %v404 = vadd.f32 0.0, %v403
    %405 = vdwg.mxu0
    %v407 = vrot.slane %v404, 4
    %v409 = vadd.f32 %v327, %v407
    %v410 = vtanh.pop %v409
    %v412 = vrot.slane %v410, 4
    %v413 = vsel %vm60, %v412, 0
    %415 = vmatpush.msra.mxu0 0.0
    %416 = vmatpush.msra.mxu0 0.0
    %417 = vmatpush.msra.mxu0 0.0
    %418 = vmatpush.msra.mxu0 0.0
    %419 = vmatpush.msra.mxu0 0.0
    %420 = vmatpush.msra.mxu0 0.0
    %421 = vmatpush.msra.mxu0 0.0
    %422 = vmatpush.msra.mxu0 0.0
    %423 = vmatpush.msra.mxu0 0.0
    %424 = vmatpush.msra.mxu0 0.0
    %425 = vmatpush.msra.mxu0 0.0
    %426 = vmatpush.msra.mxu0 0.0
    %427 = vmatpush.msra.mxu0 %v300
    %428 = vmatpush.msra.mxu0 %v299
    %429 = vmatpush.msra.mxu0 %v298
    %430 = vmatpush.msra.mxu0 %v297
    %431 = vmatmul.f32.gmra.mxu0 %v413
    %v432 = vpop.f32.mrf.mxu0
    %v433 = vadd.f32 0.0, %v432
    %434 = vdwg.mxu0
    %v436 = vrot.slane %v433, 2
    %v438 = vadd.f32 %v327, %v436
    %v439 = vtanh.pop %v438
    %v441 = vrot.slane %v439, 6
    %v442 = vsel %vm60, %v441, 0
    %444 = vmatpush.msra.mxu0 0.0
    %445 = vmatpush.msra.mxu0 0.0
    %446 = vmatpush.msra.mxu0 0.0
    %447 = vmatpush.msra.mxu0 0.0
    %448 = vmatpush.msra.mxu0 0.0
    %449 = vmatpush.msra.mxu0 0.0
    %450 = vmatpush.msra.mxu0 0.0
    %451 = vmatpush.msra.mxu0 0.0
    %452 = vmatpush.msra.mxu0 0.0
    %453 = vmatpush.msra.mxu0 0.0
    %454 = vmatpush.msra.mxu0 0.0
    %455 = vmatpush.msra.mxu0 0.0
    %456 = vmatpush.msra.mxu0 %v300
    %457 = vmatpush.msra.mxu0 %v299
    %458 = vmatpush.msra.mxu0 %v298
    %459 = vmatpush.msra.mxu0 %v297
    %460 = vmatmul.f32.gmra.mxu0 %v442
    %v461 = vpop.f32.mrf.mxu0
    %v462 = vadd.f32 0.0, %v461
    %463 = vdwg.mxu0
    %v464 = vadd.f32 %v330, %v462
    %v465 = vtanh.pop %v464
    %v467 = vsel %vm60, %v465, 0
    %469 = vmatpush.msra.mxu0 0.0
    %470 = vmatpush.msra.mxu0 0.0
    %471 = vmatpush.msra.mxu0 0.0
    %472 = vmatpush.msra.mxu0 0.0
    %473 = vmatpush.msra.mxu0 0.0
    %474 = vmatpush.msra.mxu0 0.0
    %475 = vmatpush.msra.mxu0 0.0
    %476 = vmatpush.msra.mxu0 0.0
    %477 = vmatpush.msra.mxu0 0.0
    %478 = vmatpush.msra.mxu0 0.0
    %479 = vmatpush.msra.mxu0 0.0
    %480 = vmatpush.msra.mxu0 0.0
    %481 = vmatpush.msra.mxu0 %v300
    %482 = vmatpush.msra.mxu0 %v299
    %483 = vmatpush.msra.mxu0 %v298
    %484 = vmatpush.msra.mxu0 %v297
    %485 = vmatmul.f32.gmra.mxu0 %v467
    %v486 = vpop.f32.mrf.mxu0
    %v487 = vadd.f32 0.0, %v486
    %488 = vdwg.mxu0
    %v490 = vrot.slane %v487, 6
    %v492 = vadd.f32 %v330, %v490
    %v493 = vtanh.pop %v492
    %v495 = vrot.slane %v493, 2
    %v496 = vsel %vm60, %v495, 0
    %498 = vmatpush.msra.mxu0 0.0
    %499 = vmatpush.msra.mxu0 0.0
    %500 = vmatpush.msra.mxu0 0.0
    %501 = vmatpush.msra.mxu0 0.0
    %502 = vmatpush.msra.mxu0 0.0
    %503 = vmatpush.msra.mxu0 0.0
    %504 = vmatpush.msra.mxu0 0.0
    %505 = vmatpush.msra.mxu0 0.0
    %506 = vmatpush.msra.mxu0 0.0
    %507 = vmatpush.msra.mxu0 0.0
    %508 = vmatpush.msra.mxu0 0.0
    %509 = vmatpush.msra.mxu0 0.0
    %510 = vmatpush.msra.mxu0 %v300
    %511 = vmatpush.msra.mxu0 %v299
    %512 = vmatpush.msra.mxu0 %v298
    %513 = vmatpush.msra.mxu0 %v297
    %514 = vmatmul.f32.gmra.mxu0 %v496
    %v515 = vpop.f32.mrf.mxu0
    %v516 = vadd.f32 0.0, %v515
    %517 = vdwg.mxu0
    %v519 = vrot.slane %v516, 4
    %v521 = vadd.f32 %v330, %v519
    %v522 = vtanh.pop %v521
    %v524 = vrot.slane %v522, 4
    %v525 = vsel %vm60, %v524, 0
    %527 = vmatpush.msra.mxu0 0.0
    %528 = vmatpush.msra.mxu0 0.0
    %529 = vmatpush.msra.mxu0 0.0
    %530 = vmatpush.msra.mxu0 0.0
    %531 = vmatpush.msra.mxu0 0.0
    %532 = vmatpush.msra.mxu0 0.0
    %533 = vmatpush.msra.mxu0 0.0
    %534 = vmatpush.msra.mxu0 0.0
    %535 = vmatpush.msra.mxu0 0.0
    %536 = vmatpush.msra.mxu0 0.0
    %537 = vmatpush.msra.mxu0 0.0
    %538 = vmatpush.msra.mxu0 0.0
    %539 = vmatpush.msra.mxu0 %v300
    %540 = vmatpush.msra.mxu0 %v299
    %541 = vmatpush.msra.mxu0 %v298
    %542 = vmatpush.msra.mxu0 %v297
    %543 = vmatmul.f32.gmra.mxu0 %v525
    %v544 = vpop.f32.mrf.mxu0
    %v545 = vadd.f32 0.0, %v544
    %546 = vdwg.mxu0
    %v548 = vrot.slane %v545, 2
    %v550 = vadd.f32 %v330, %v548
    %v551 = vtanh.pop %v550
    %v552 = vsel %vm284, %v353, %v381
    %v553 = vsel %vm286, %v552, %v410
    %v554 = vsel %vm288, %v553, %v439
    %v555 = vsel %vm284, %v465, %v493
    %v556 = vsel %vm286, %v555, %v522
    %v557 = vsel %vm288, %v556, %v551
    %v559 = vrot.slane %v283, 6
    %v562 = vrot.slane %v551, 4
    %v564 = vsel %vm284, %v559, %v562
    %vm565 = vcmask 257024
    %566 = vst.msk [vmem:[#allocation2] sm:$0xf] %vm565, %v564
    %v567 = vld [vmem:[%s3] sm:$0xff]
    %v568 = vld [vmem:[%s3 + $0x8] sm:$0xff]
    %v569 = vld [vmem:[%s3 + $0x10] sm:$0xff]
    %v570 = vld [vmem:[%s3 + $0x18] sm:$0xff]
    %v571 = vld [vmem:[%s3 + $0x20] sm:$0x1]
    %v572 = vmax.f32 %v554, 0.0
    %v573 = vmax.f32 %v557, 0.0
    %v574 = vperm.slane %v571, 0
    %v576 = vsel %vm60, %v572, 0
    %v579 = vsel %vm60, %v573, 0
    %581 = vmatpush.msra.mxu0 0.0
    %582 = vmatpush.msra.mxu0 0.0
    %583 = vmatpush.msra.mxu0 0.0
    %584 = vmatpush.msra.mxu0 0.0
    %585 = vmatpush.msra.mxu0 0.0
    %586 = vmatpush.msra.mxu0 0.0
    %587 = vmatpush.msra.mxu0 0.0
    %588 = vmatpush.msra.mxu0 0.0
    %589 = vmatpush.msra.mxu0 0.0
    %590 = vmatpush.msra.mxu0 0.0
    %591 = vmatpush.msra.mxu0 0.0
    %592 = vmatpush.msra.mxu0 0.0
    %593 = vmatpush.msra.mxu0 %v570
    %594 = vmatpush.msra.mxu0 %v569
    %595 = vmatpush.msra.mxu0 %v568
    %596 = vmatpush.msra.mxu0 %v567
    %597 = vmatmul.f32.gmra.mxu0 %v576
    %v598 = vpop.f32.mrf.mxu0
    %v599 = vadd.f32 %v574, %v598
    %600 = vmatmul.f32.gmra.mxu0 %v579
    %v601 = vpop.f32.mrf.mxu0
    %v602 = vadd.f32 %v574, %v601
    %603 = vdwg.mxu0
    %604 = vmax.xlane.f32.xlu0 %v599
    %v605 = vpop.xlane.xlu0 %604
    %606 = vmax.xlane.f32.xlu0 %v602
    %v607 = vpop.xlane.xlu0 %606
    %v608 = vsub.f32 %v599, %v605
    %v609 = vsub.f32 %v602, %v607
    %v610 = vmul.f32 %v608, 1.442695
    %v611 = vpow.pop %v610
    %v612 = vmul.f32 %v609, 1.442695
    %v613 = vpow.pop %v612
    %614 = vadd.xlane.f32.xlu0 %v611
    %v615 = vpop.xlane.xlu0 %614
    %616 = vadd.xlane.f32.xlu0 %v613
    %v617 = vpop.xlane.xlu0 %616
    %v618 = vrcp.pop %v615
    %v619 = vmul.f32 %v615, %v618
    %v620 = vsub.f32 1.0, %v619
    %v621 = vmul.f32 %v618, %v620
    %v622 = vadd.f32 %v618, %v621
    %vm623 = vweird.f32 %v615
    %vm624 = vweird.f32 %v618
    %vm625 = vmor %vm623, %vm624
    %v626 = vsel %vm625, %v618, %v622
    %v627 = vand.u32 2147483647, %v615
    %vm628 = vcmp.eq.f32.partialorder %v627, 8.507059e+37
    %v629 = vand.u32 %v615, 2147483648
    %v630 = vor.u32 1.1754944e-38, %v629
    %v631 = vsel %vm628, %v630, %v626
    %v632 = vmul.f32 %v611, %v631
    %v633 = vrcp.pop %v617
    %v634 = vmul.f32 %v617, %v633
    %v635 = vsub.f32 1.0, %v634
    %v636 = vmul.f32 %v633, %v635
    %v637 = vadd.f32 %v633, %v636
    %vm638 = vweird.f32 %v617
    %vm639 = vweird.f32 %v633
    %vm640 = vmor %vm638, %vm639
    %v641 = vsel %vm640, %v633, %v637
    %v642 = vand.u32 2147483647, %v617
    %vm643 = vcmp.eq.f32.partialorder %v642, 8.507059e+37
    %v644 = vand.u32 %v617, 2147483648
    %v645 = vor.u32 1.1754944e-38, %v644
    %v646 = vsel %vm643, %v645, %v641
    %v647 = vmul.f32 %v613, %v646
    %648 = vst [vmem:[%s4] sm:$0xff] %v632
    %649 = vst [vmem:[%s4 + $0x8] sm:$0xff] %v647
    // Predicated region
    $region18: #{autoregressive_rnn_forward.1} parent=1 // pred_check
      _
    $region19: #{autoregressive_rnn_forward.1} parent=1 // pred_check_branch
      %651 = sbr.rel (0) target = $region21
    $region20: #{autoregressive_rnn_forward.1} parent=1 // pred_region
      _
    $region21: #{autoregressive_rnn_forward.1} parent=1 // pred_fallthru
      _
    // Predicated region
    $region22: #{autoregressive_rnn_forward.1} parent=1 // pred_check
      _
    $region23: #{autoregressive_rnn_forward.1} parent=1 // pred_check_branch
      %653 = sbr.rel (0) target = $region25
    $region24: #{autoregressive_rnn_forward.1} parent=1 // pred_region
      %655 = vsyncadd [#allocation3], 0
      %s657 = sshll.u32 [#allocation2], 4
      %s658 = int_to_ptr.vmem [resolvable:$true] %s657
      %s659 = sshll.u32 %s5, 4
      %s660 = int_to_ptr.hbm [resolvable:$true] %s659
      %662 = dma.vmem_to_hbm [thread:$0]  %s658, 64, %s660, [#allocation3]
    $region25: #{autoregressive_rnn_forward.1} parent=1 // pred_fallthru
      _
    // Predicated region
    $region26: #{autoregressive_rnn_forward.1} parent=1 // pred_check
      _
    $region27: #{autoregressive_rnn_forward.1} parent=1 // pred_check_branch
      %664 = sbr.rel (0) target = $region29
    $region28: #{autoregressive_rnn_forward.1} parent=1 // pred_region
      _
    $region29: #{autoregressive_rnn_forward.1} parent=1 // pred_fallthru
      _
    // Predicated region
    $region30: #{autoregressive_rnn_forward.1} parent=1 // pred_check
      _
    $region31: #{autoregressive_rnn_forward.1} parent=1 // pred_check_branch
      %666 = sbr.rel (0) target = $region33
    $region32: #{autoregressive_rnn_forward.1} parent=1 // pred_region
      %668 = dma.done [#allocation3], 64
    $region33: #{autoregressive_rnn_forward.1} parent=1 // pred_fallthru
      _
    %669 = vsyncpa [#allocation3], 1

</llo_original>
